<compile_context>
chip_gen: v6e
topology: v6e:2x2x1
jax: 0.10.0
libtpu: 0.0.40
codegen_flags: <defaults>
</compile_context>

<pallas_src>
import functools

import jax
import jax.numpy as jnp
from jax.experimental import pallas as pl
from jax.experimental.pallas import tpu as pltpu


_VMEM_LIMIT_BYTES = 32 * 1024 * 1024   # safe on v5e/v6e (128 MiB phys) and v7x (64 MiB)
_VMEM_BUDGET_BYTES = 12 * 1024 * 1024  # conservative per-step working-set target


# --------------------------- fused single-pass path ---------------------------

def _fused_kernel(x_ref, w_ref, b_ref, o_ref, *, eps, inv_total):
    # One batch element per grid step: read x once, stats + apply, write once.
    x = x_ref[...].astype(jnp.float32)                    # (1, C, T)
    mean = jnp.sum(x) * inv_total
    d = x - mean
    var = jnp.sum(d * d) * inv_total                      # exact centered variance
    inv_std = jax.lax.rsqrt(var + eps)
    scale = w_ref[...].astype(jnp.float32) * inv_std      # (1, C, 1)
    o_ref[...] = (d * scale + b_ref[...].astype(jnp.float32)).astype(o_ref.dtype)


def _fused_fits(C, T, itemsize, budget=_VMEM_BUDGET_BYTES):
    # in + out blocks (double-buffered over n) + ~3 full-size f32 temporaries.
    need = 4 * C * T * itemsize + 3 * C * T * 4
    return need <= budget


def _fused_gln(x, w, b, eps):
    N, C, T = x.shape
    kernel = functools.partial(_fused_kernel, eps=float(eps),
                               inv_total=float(1.0 / (C * T)))
    return pl.pallas_call(
        kernel,
        out_shape=jax.ShapeDtypeStruct((N, C, T), x.dtype),
        grid_spec=pltpu.PrefetchScalarGridSpec(
            num_scalar_prefetch=0,
            grid=(N,),
            in_specs=[
                pl.BlockSpec((1, C, T), lambda n: (n, 0, 0)),
                pl.BlockSpec((1, C, 1), lambda n: (0, 0, 0)),
                pl.BlockSpec((1, C, 1), lambda n: (0, 0, 0)),
            ],
            out_specs=pl.BlockSpec((1, C, T), lambda n: (n, 0, 0)),
        ),
        compiler_params=pltpu.CompilerParams(
            dimension_semantics=("parallel",),
            vmem_limit_bytes=_VMEM_LIMIT_BYTES),
    )(x, w, b)


# ------------------------------ tiled fallback --------------------------------

def _pick_time_tile(C, T, itemsize, budget=_VMEM_BUDGET_BYTES):
    """Largest lane-dense (multiple-of-128) time tile whose per-step working set
    (in + out double-buffered + f32 temporaries) stays under the budget.
    Never falls back to an unbounded full-extent block."""
    if T <= 128:
        return T                          # full-extent block: always legal, tiny
    per_col = C * (4 * itemsize + 8)      # bytes per time column (in+out x2 + f32 temps)
    cap = max(budget // per_col, 128)
    cap = min(cap, 2048, T)               # diminishing returns past ~2K columns
    return max((cap // 128) * 128, 128)


def _stats_kernel(x_ref, sum_ref, sumsq_ref, *, T, tT, acc_w, needs_mask):
    # Lane-dense (1, C, acc_w) partial sum / sum-of-squares accumulators
    # (pure VALU adds; the acc_w -> 1 lane reduce happens once, in pass 2).
    @pl.when(pl.program_id(1) == 0)
    def _():
        sum_ref[...] = jnp.zeros_like(sum_ref)
        sumsq_ref[...] = jnp.zeros_like(sumsq_ref)

    C = x_ref.shape[1]
    acc_s = jnp.zeros((1, C, acc_w), jnp.float32)
    acc_q = jnp.zeros((1, C, acc_w), jnp.float32)
    if needs_mask:
        lane = jax.lax.broadcasted_iota(jnp.int32, (1, C, acc_w), 2)  # hoisted
        t0 = pl.program_id(1) * tT
    for j in range(tT // acc_w):                      # static unroll, VALU only
        chunk = x_ref[:, :, j * acc_w:(j + 1) * acc_w].astype(jnp.float32)
        if needs_mask:
            chunk = jnp.where(t0 + j * acc_w + lane < T, chunk, 0.0)
        acc_s = acc_s + chunk
        acc_q = acc_q + chunk * chunk
    sum_ref[...] += acc_s
    sumsq_ref[...] += acc_q


def _apply_kernel(x_ref, sum_ref, sumsq_ref, w_ref, b_ref, o_ref, *,
                  eps, inv_total):
    # Finalize folded in: recompute the scalar stats from the lane-dense
    # partials each tile (cheap vs the HBM-bound tile stream) so both grid
    # axes can stay "parallel".
    mean = jnp.sum(sum_ref[...]) * inv_total
    ex2 = jnp.sum(sumsq_ref[...]) * inv_total
    # NOTE: E[x^2] - mean^2 in f32; clamp keeps it non-negative.
    var = jnp.maximum(ex2 - mean * mean, 0.0)
    inv_std = jax.lax.rsqrt(var + eps)
    scale = w_ref[...].astype(jnp.float32) * inv_std   # (1, C, 1)
    shift = b_ref[...].astype(jnp.float32) - mean * scale
    x = x_ref[...].astype(jnp.float32)
    o_ref[...] = (x * scale + shift).astype(o_ref.dtype)


def _tiled_gln(x, w, b, eps):
    N, C, T = x.shape
    itemsize = jnp.dtype(x.dtype).itemsize
    tT = _pick_time_tile(C, T, itemsize)
    nT = pl.cdiv(T, tT)
    acc_w = 128 if tT % 128 == 0 else tT              # tT < 128 only when tT == T
    needs_mask = (nT * tT != T)
    inv_total = float(1.0 / (C * T))

    stats = functools.partial(_stats_kernel, T=T, tT=tT, acc_w=acc_w,
                              needs_mask=needs_mask)
    sum_c, sumsq_c = pl.pallas_call(
        stats,
        out_shape=(jax.ShapeDtypeStruct((N, C, acc_w), jnp.float32),
                   jax.ShapeDtypeStruct((N, C, acc_w), jnp.float32)),
        grid_spec=pltpu.PrefetchScalarGridSpec(
            num_scalar_prefetch=0,
            grid=(N, nT),
            in_specs=[pl.BlockSpec((1, C, tT), lambda n, t: (n, 0, t))],
            out_specs=[pl.BlockSpec((1, C, acc_w), lambda n, t: (n, 0, 0)),
                       pl.BlockSpec((1, C, acc_w), lambda n, t: (n, 0, 0))],
        ),
        compiler_params=pltpu.CompilerParams(
            dimension_semantics=("parallel", "arbitrary"),
            vmem_limit_bytes=_VMEM_LIMIT_BYTES),
    )(x)

    apply = functools.partial(_apply_kernel, eps=float(eps), inv_total=inv_total)
    return pl.pallas_call(
        apply,
        out_shape=jax.ShapeDtypeStruct((N, C, T), x.dtype),
        grid_spec=pltpu.PrefetchScalarGridSpec(
            num_scalar_prefetch=0,
            grid=(N, nT),
            in_specs=[
                pl.BlockSpec((1, C, tT), lambda n, t: (n, 0, t)),
                pl.BlockSpec((1, C, acc_w), lambda n, t: (n, 0, 0)),
                pl.BlockSpec((1, C, acc_w), lambda n, t: (n, 0, 0)),
                pl.BlockSpec((1, C, 1), lambda n, t: (0, 0, 0)),
                pl.BlockSpec((1, C, 1), lambda n, t: (0, 0, 0)),
            ],
            out_specs=pl.BlockSpec((1, C, tT), lambda n, t: (n, 0, t)),
        ),
        compiler_params=pltpu.CompilerParams(
            dimension_semantics=("parallel", "parallel"),
            vmem_limit_bytes=_VMEM_LIMIT_BYTES),
    )(x, sum_c, sumsq_c, w, b)


# ---------------------------------- wrapper -----------------------------------

def global_layer_norm(x, weight=None, bias=None, eps=1e-5, force_tiled=False):
    """x: [N, C, T]; weight, bias: [C, 1] (or None for no affine)."""
    if x.ndim != 3:
        raise ValueError("GlobalLayerNorm accepts a 3D tensor as input")
    N, C, T = x.shape
    w = (jnp.ones((1, C, 1), jnp.float32) if weight is None
         else weight.astype(jnp.float32).reshape(1, C, 1))
    b = (jnp.zeros((1, C, 1), jnp.float32) if bias is None
         else bias.astype(jnp.float32).reshape(1, C, 1))
    itemsize = jnp.dtype(x.dtype).itemsize
    if not force_tiled and _fused_fits(C, T, itemsize):
        return _fused_gln(x, w, b, eps)
    return _tiled_gln(x, w, b, eps)


def global_layer_norm_ref(x, weight, bias, eps=1e-5):
    mean = jnp.mean(x, axis=(1, 2), keepdims=True)
    var = jnp.mean((x - mean) ** 2, axis=(1, 2), keepdims=True)
    y = (x - mean) / jnp.sqrt(var + eps)
    if weight is not None:
        y = weight[None] * y + bias[None]
    return y


if __name__ == "__main__":
    key = jax.random.PRNGKey(0)
    kx, kw, kb, kx2, kw2, kb2 = jax.random.split(key, 6)

    # Case 1: small module-like shapes -> fused single-pass kernel.
    N, C, T = 2, 4, 16
    x = jax.random.normal(kx, (N, C, T), dtype=jnp.float32)
    weight = jnp.ones((C, 1), jnp.float32) + 0.1 * jax.random.normal(kw, (C, 1))
    bias = jnp.zeros((C, 1), jnp.float32) + 0.1 * jax.random.normal(kb, (C, 1))
    out = jax.block_until_ready(global_layer_norm(x, weight, bias, eps=1e-5))
    ref = global_layer_norm_ref(x, weight, bias, eps=1e-5)
    assert out.shape == (N, C, T)
    assert jnp.allclose(out, ref, atol=1e-4, rtol=1e-4), "fused path mismatch"

    # Case 2: force the tiled two-pass path (cdiv grid + masked tail tile).
    N2, C2, T2 = 2, 8, 200   # T2 not a multiple of 128 -> exercises masking
    x2 = jax.random.normal(kx2, (N2, C2, T2), dtype=jnp.float32)
    w2 = jnp.ones((C2, 1), jnp.float32) + 0.1 * jax.random.normal(kw2, (C2, 1))
    b2 = 0.1 * jax.random.normal(kb2, (C2, 1))
    out2 = jax.block_until_ready(
        global_layer_norm(x2, w2, b2, eps=1e-5, force_tiled=True))
    ref2 = global_layer_norm_ref(x2, w2, b2, eps=1e-5)
    assert out2.shape == (N2, C2, T2)
    assert jnp.allclose(out2, ref2, atol=1e-4, rtol=1e-4), "tiled path mismatch"

    print("KERNEL_OK")
</pallas_src>

<mosaic_0001>
module attributes {stable_mosaic.version = 11 : i64} {
  func.func @_fused_kernel(%arg0: i32, %arg1: memref<1x4x16xf32, #tpu.memory_space<vmem>>, %arg2: memref<1x4x1xf32, #tpu.memory_space<vmem>>, %arg3: memref<1x4x1xf32, #tpu.memory_space<vmem>>, %arg4: memref<1x4x16xf32, #tpu.memory_space<vmem>>) attributes {dimension_semantics = [#tpu.dimension_semantics<parallel>], iteration_bounds = array<i64: 2>, scalar_prefetch = 0 : i64, scratch_operands = 0 : i64, tpu.core_type = #tpu.core_type<tc>, window_params = [{transform_indices = @transform_0, window_bounds = array<i64: 1, 4, 16>}, {pipeline_mode = #tpu.pipeline_mode<synchronous>, transform_indices = @transform_1, window_bounds = array<i64: 1, 4, 1>}, {pipeline_mode = #tpu.pipeline_mode<synchronous>, transform_indices = @transform_2, window_bounds = array<i64: 1, 4, 1>}, {transform_indices = @transform_3, window_bounds = array<i64: 1, 4, 16>}]} {
    %c0 = arith.constant 0 : index
    %c0_0 = arith.constant 0 : index
    %c0_1 = arith.constant 0 : index
    %0 = vector.load %arg1[%c0, %c0_0, %c0_1] : memref<1x4x16xf32, #tpu.memory_space<vmem>>, vector<1x4x16xf32>
    %1 = vector.shape_cast %0 : vector<1x4x16xf32> to vector<1x1x4x16xf32>
    %cst = arith.constant dense<0.000000e+00> : vector<1xf32>
    %2 = vector.multi_reduction <add>, %1, %cst [1, 2, 3] : vector<1x1x4x16xf32> to vector<1xf32>
    %3 = vector.shape_cast %2 : vector<1xf32> to vector<1x1x1x1xf32>
    %4 = vector.extract %3[0, 0, 0, 0] : f32 from vector<1x1x1x1xf32>
    %cst_2 = arith.constant 1.562500e-02 : f32
    %5 = arith.mulf %4, %cst_2 : f32
    %6 = vector.broadcast %5 : f32 to vector<1x4x16xf32>
    %7 = arith.subf %0, %6 : vector<1x4x16xf32>
    %8 = arith.mulf %7, %7 : vector<1x4x16xf32>
    %9 = vector.shape_cast %8 : vector<1x4x16xf32> to vector<1x1x4x16xf32>
    %cst_3 = arith.constant dense<0.000000e+00> : vector<1xf32>
    %10 = vector.multi_reduction <add>, %9, %cst_3 [1, 2, 3] : vector<1x1x4x16xf32> to vector<1xf32>
    %11 = vector.shape_cast %10 : vector<1xf32> to vector<1x1x1x1xf32>
    %12 = vector.extract %11[0, 0, 0, 0] : f32 from vector<1x1x1x1xf32>
    %cst_4 = arith.constant 1.562500e-02 : f32
    %13 = arith.mulf %12, %cst_4 : f32
    %cst_5 = arith.constant 9.99999974E-6 : f32
    %14 = arith.addf %13, %cst_5 : f32
    %15 = math.rsqrt %14 : f32
    %c0_6 = arith.constant 0 : index
    %c0_7 = arith.constant 0 : index
    %c0_8 = arith.constant 0 : index
    %16 = vector.load %arg2[%c0_6, %c0_7, %c0_8] : memref<1x4x1xf32, #tpu.memory_space<vmem>>, vector<1x4x1xf32>
    %17 = vector.broadcast %15 : f32 to vector<1x4x1xf32>
    %18 = arith.mulf %16, %17 : vector<1x4x1xf32>
    %19 = vector.broadcast %18 : vector<1x4x1xf32> to vector<1x4x16xf32>
    %20 = arith.mulf %7, %19 : vector<1x4x16xf32>
    %c0_9 = arith.constant 0 : index
    %c0_10 = arith.constant 0 : index
    %c0_11 = arith.constant 0 : index
    %21 = vector.load %arg3[%c0_9, %c0_10, %c0_11] : memref<1x4x1xf32, #tpu.memory_space<vmem>>, vector<1x4x1xf32>
    %22 = vector.broadcast %21 : vector<1x4x1xf32> to vector<1x4x16xf32>
    %23 = arith.addf %20, %22 : vector<1x4x16xf32>
    %c0_12 = arith.constant 0 : index
    %c0_13 = arith.constant 0 : index
    %c0_14 = arith.constant 0 : index
    %24 = vector.load %arg4[%c0_12, %c0_13, %c0_14] : memref<1x4x16xf32, #tpu.memory_space<vmem>>, vector<1x4x16xf32>
    tpu.vector_store %arg4[%c0_12, %c0_13, %c0_14], %23 {strides = array<i32>} : memref<1x4x16xf32, #tpu.memory_space<vmem>>, vector<1x4x16xf32>,
    return
  }
  func.func @transform_0(%arg0: i32) -> (i32, i32, i32) {
    %c0_i32 = arith.constant 0 : i32
    %c0_i32_0 = arith.constant 0 : i32
    %c0_i32_1 = arith.constant 0 : i32
    return %arg0, %c0_i32, %c0_i32_0 : i32, i32, i32
  }
  func.func @transform_1(%arg0: i32) -> (i32, i32, i32) {
    %c0_i32 = arith.constant 0 : i32
    %c0_i32_0 = arith.constant 0 : i32
    %c0_i32_1 = arith.constant 0 : i32
    %c0_i32_2 = arith.constant 0 : i32
    return %c0_i32, %c0_i32_0, %c0_i32_1 : i32, i32, i32
  }
  func.func @transform_2(%arg0: i32) -> (i32, i32, i32) {
    %c0_i32 = arith.constant 0 : i32
    %c0_i32_0 = arith.constant 0 : i32
    %c0_i32_1 = arith.constant 0 : i32
    %c0_i32_2 = arith.constant 0 : i32
    return %c0_i32, %c0_i32_0, %c0_i32_1 : i32, i32, i32
  }
  func.func @transform_3(%arg0: i32) -> (i32, i32, i32) {
    %c0_i32 = arith.constant 0 : i32
    %c0_i32_0 = arith.constant 0 : i32
    %c0_i32_1 = arith.constant 0 : i32
    return %arg0, %c0_i32, %c0_i32_0 : i32, i32, i32
  }
}

</mosaic_0001>

<llo_original>
// kernel: tpu_custom_call.1
$region0: #{tpu_custom_call.1}
  #allocation0 [shape = 'u32[]', space=smem, size = 0x4, offset = 0x4, fixed_abs, tag = 'smem constant byte address 0x4 - core index']
  #allocation1 [shape = 'u32[144,128]{1,0:T(1,128)}', space=vmem, size = 0x12000, scoped, tag = 'internal scratch']
  %s0 = inlined_call_operand.vmem [shape: f32[2,4,16], index: 0, kind: input, shape index: {}]
  %s1 = inlined_call_operand.vmem [shape: f32[1,4,1], index: 1, kind: input, shape index: {}]
  %s2 = inlined_call_operand.vmem [shape: f32[1,4,1], index: 2, kind: input, shape index: {}]
  %s3 = inlined_call_operand.hbm [shape: f32[2,4,16], index: 3, kind: output, shape index: {}]
  %s4 = sld [smem:[#allocation0]]
  $region45: #{tpu_custom_call.1} parent=0
    _
  %s6 = ssub.s32 1, %s4
  %s7 = scalar_select 0, %s6, %s4
  $region1: #{tpu_custom_call.1} parent=0
    #allocation2 [shape = 'u8[4096]{0}', space=vmem, size = 0x1000, scoped, tag = 'output window, operand 0']
    #allocation3 [shape = 's32[2]{0}', space=sflag, size = 0x8, scoped, tag = 'scoped memory for tpu_custom_call.1']
    %8 = vsyncpa [#allocation3], 0
    %s9 = scalar_lea.sflag [#allocation3], 1
    %10 = vsyncpa %s9, 0
    loop: start=0, step=1, limit=4
    $region2: #{tpu_custom_call.1} parent=1 // loop_pre_header
      _
    $region3: #{tpu_custom_call.1} parent=1 // loop_header
      %s12 = sphi 0, %s16
      %p13 = scmp.ge.s32.totalorder %s12, 4
      %s22 = sphi 0, %s24
      %s25 = sphi 0, %s22
      %s26 = sphi 0, %s25
      %s42 = sphi 0, %s26
      %s46 = sphi 0, %s46
      %s48 = sphi 0, %s46
      %s49 = sphi 0, %s48
      %s63 = sphi 0, %s49
      %s67 = sphi 0, %s67
      %s69 = sphi 0, %s67
      %s70 = sphi 0, %s69
      %s84 = sphi 0, %s70
      %s90 = sphi 0, %s92
      %s93 = sphi 0, %s90
      %s94 = sphi 0, %s93
      %s110 = sphi 0, %s94
    $region4: #{tpu_custom_call.1} parent=1 // loop_header_branch
      %15 = sbr.rel (%p13) target = $region8
    $region5: #{tpu_custom_call.1} parent=1 // loop_body
      %s17 = ssub.s32 %s12, 1
      %s18 = ssub.s32 %s12, 2
      %s19 = sadd.s32 %s12, 1
      %s20 = ssub.s32 %s12, %s19
      %p21 = scmp.eq.s32.totalorder %s20, 0
      %s23 = sadd.s32 %s22, 1
      %s24 = scalar_select %p21, %s22, %s23
      %p27 = pneg %p21
      %p28 = scmp.eq.s32.totalorder %s12, 1
      %p29 = por %p27, %p28
      %p30 = scmp.ne.s32.totalorder %s22, %s25
      %p31 = scmp.eq.s32.totalorder %s12, 0
      %p32 = por %p30, %p31
      %p33 = scmp.ne.s32.totalorder %s22, %s25
      %p34 = scmp.eq.s32.totalorder %s17, 1
      %p35 = por %p33, %p34
      %p36 = scmp.ne.s32.totalorder %s25, %s26
      %p37 = scmp.eq.s32.totalorder %s17, 0
      %p38 = por %p36, %p37
      %p39 = scmp.ne.s32.totalorder %s25, %s26
      %p40 = scmp.eq.s32.totalorder %s18, 1
      %p41 = por %p39, %p40
      %p43 = scmp.ne.s32.totalorder %s26, %s42
      %p44 = scmp.eq.s32.totalorder %s18, 0
      %p45 = por %p43, %p44
      %s47 = sadd.s32 %s46, 1
      %p50 = scmp.eq.s32.totalorder %s12, 1
      %p51 = scmp.ne.s32.totalorder %s46, %s48
      %p52 = scmp.eq.s32.totalorder %s12, 0
      %p53 = por %p51, %p52
      %p54 = scmp.ne.s32.totalorder %s46, %s48
      %p55 = scmp.eq.s32.totalorder %s17, 1
      %p56 = por %p54, %p55
      %p57 = scmp.ne.s32.totalorder %s48, %s49
      %p58 = scmp.eq.s32.totalorder %s17, 0
      %p59 = por %p57, %p58
      %p60 = scmp.ne.s32.totalorder %s48, %s49
      %p61 = scmp.eq.s32.totalorder %s18, 1
      %p62 = por %p60, %p61
      %p64 = scmp.ne.s32.totalorder %s49, %s63
      %p65 = scmp.eq.s32.totalorder %s18, 0
      %p66 = por %p64, %p65
      %s68 = sadd.s32 %s67, 1
      %p71 = scmp.eq.s32.totalorder %s12, 1
      %p72 = scmp.ne.s32.totalorder %s67, %s69
      %p73 = scmp.eq.s32.totalorder %s12, 0
      %p74 = por %p72, %p73
      %p75 = scmp.ne.s32.totalorder %s67, %s69
      %p76 = scmp.eq.s32.totalorder %s17, 1
      %p77 = por %p75, %p76
      %p78 = scmp.ne.s32.totalorder %s69, %s70
      %p79 = scmp.eq.s32.totalorder %s17, 0
      %p80 = por %p78, %p79
      %p81 = scmp.ne.s32.totalorder %s69, %s70
      %p82 = scmp.eq.s32.totalorder %s18, 1
      %p83 = por %p81, %p82
      %p85 = scmp.ne.s32.totalorder %s70, %s84
      %p86 = scmp.eq.s32.totalorder %s18, 0
      %p87 = por %p85, %p86
      %s88 = ssub.s32 %s12, %s19
      %p89 = scmp.eq.s32.totalorder %s88, 0
      %s91 = sadd.s32 %s90, 1
      %s92 = scalar_select %p89, %s90, %s91
      %p95 = pneg %p89
      %p96 = scmp.eq.s32.totalorder %s12, 1
      %p97 = por %p95, %p96
      %p98 = scmp.ne.s32.totalorder %s90, %s93
      %p99 = scmp.eq.s32.totalorder %s12, 0
      %p100 = por %p98, %p99
      %p101 = scmp.ne.s32.totalorder %s90, %s93
      %p102 = scmp.eq.s32.totalorder %s17, 1
      %p103 = por %p101, %p102
      %p104 = scmp.ne.s32.totalorder %s93, %s94
      %p105 = scmp.eq.s32.totalorder %s17, 0
      %p106 = por %p104, %p105
      %p107 = scmp.ne.s32.totalorder %s93, %s94
      %p108 = scmp.eq.s32.totalorder %s18, 1
      %p109 = por %p107, %p108
      %p111 = scmp.ne.s32.totalorder %s94, %s110
      %p112 = scmp.eq.s32.totalorder %s18, 0
      %p113 = por %p111, %p112
      %p114 = scmp.le.s32.totalorder 1, %s12
      %p115 = scmp.lt.s32.totalorder %s12, 3
      %p116 = pnand %p114, %p115
      %p117 = pneg %p116
      // Predicated region
      $region9: #{tpu_custom_call.1} parent=5 // pred_check
        _
      $region10: #{tpu_custom_call.1} parent=5 // pred_check_branch
        %119 = sbr.rel (%p116) target = $region12
      $region11: #{tpu_custom_call.1} parent=5 // pred_region
        %s120 = ssub.s32 %s12, 1
        // Predicated region
        $region13: #{tpu_custom_call.1} parent=11 // pred_check
          %p121 = pneg %p59
        $region14: #{tpu_custom_call.1} parent=11 // pred_check_branch
          %123 = sbr.rel (%p121) target = $region16
        $region15: #{tpu_custom_call.1} parent=11 // pred_region
          _
        $region16: #{tpu_custom_call.1} parent=11 // pred_fallthru
          _
        // Predicated region
        $region17: #{tpu_custom_call.1} parent=11 // pred_check
          %p124 = pneg %p80
        $region18: #{tpu_custom_call.1} parent=11 // pred_check_branch
          %126 = sbr.rel (%p124) target = $region20
        $region19: #{tpu_custom_call.1} parent=11 // pred_region
          _
        $region20: #{tpu_custom_call.1} parent=11 // pred_fallthru
          _
      $region12: #{tpu_custom_call.1} parent=5 // pred_fallthru
        _
      %p127 = scmp.lt.s32.totalorder %s12, 2
      // Predicated region
      $region21: #{tpu_custom_call.1} parent=5 // pred_check
        %p128 = pneg %p127
      $region22: #{tpu_custom_call.1} parent=5 // pred_check_branch
        %130 = sbr.rel (%p128) target = $region24
      $region23: #{tpu_custom_call.1} parent=5 // pred_region
        // Predicated region
        $region25: #{tpu_custom_call.1} parent=23 // pred_check
          %p131 = pneg %p32
        $region26: #{tpu_custom_call.1} parent=23 // pred_check_branch
          %133 = sbr.rel (%p131) target = $region28
        $region27: #{tpu_custom_call.1} parent=23 // pred_region
          %p134 = scmp.lt.s32.totalorder %s12, 1
          %s135 = scalar_select %p134, %s12, 1
          %s136 = smul.addr %s135, 4
          %s137 = scalar_lea.vmem %s0, %s136
        $region28: #{tpu_custom_call.1} parent=23 // pred_fallthru
          _
      $region24: #{tpu_custom_call.1} parent=5 // pred_fallthru
        _
      %p138 = scmp.le.s32.totalorder 1, %s12
      %p139 = scmp.lt.s32.totalorder %s12, 3
      %p140 = pnand %p138, %p139
      %p141 = pneg %p140
      // Predicated region
      $region29: #{tpu_custom_call.1} parent=5 // pred_check
        _
      $region30: #{tpu_custom_call.1} parent=5 // pred_check_branch
        %143 = sbr.rel (%p140) target = $region32
      $region31: #{tpu_custom_call.1} parent=5 // pred_region
        %s144 = ssub.s32 %s12, 1
        %p145 = scmp.lt.s32.totalorder %s17, 1
        %s146 = scalar_select %p145, %s17, 1
        %s147 = smul.addr %s146, 4
        %s148 = scalar_lea.vmem %s0, %s147
        %p149 = pneg %p38
        %p150 = pneg %p35
        %p151 = pneg %p59
        %p152 = pneg %p56
        %p153 = pneg %p80
        %p154 = pneg %p77
        %p155 = pneg %p106
        %p156 = pneg %p103
        %s157 = sand.u32 %s93, 1
        %s158 = scalar_lea.sflag [#allocation3], %s157
        %s159 = sand.u32 %s93, 1
        %s160 = smul.addr %s159, 4
        %s161 = scalar_lea.vmem [#allocation2], %s160
        %p162 = scmp.lt.s32.totalorder %s17, 1
        %s163 = scalar_select %p162, %s17, 1
        %s164 = smul.addr %s163, 4
        %s165 = scalar_lea.vmem %s0, %s164
        %v166 = vld [vmem:[%s165] sm:$0xf]
        %vm167 = vcmask 125952
        %v168 = vsel %vm167, %v166, 0.0
        %169 = vadd.xlane.f32.xlu0 %v168
        %v170 = vpop.xlane.xlu0 %169
        %v171 = vrot.slane %v170, 4
        %v172 = vadd.f32 %v170, %v171
        %v173 = vrot.slane %v172, 2
        %v174 = vadd.f32 %v172, %v173
        %v175 = vrot.slane %v174, 1
        %v176 = vadd.f32 %v174, %v175
        %s177 = vtos %v176
        %s178 = smul.f32 %s177, 0.015625
        %v179 = vstv %s178
        %v180 = vsub.f32 %v166, %v179
        %v181 = vmul.f32 %v180, %v180
        %v182 = vsel %vm167, %v181, 0.0
        %183 = vadd.xlane.f32.xlu0 %v182
        %v184 = vpop.xlane.xlu0 %183
        %v185 = vrot.slane %v184, 4
        %v186 = vadd.f32 %v184, %v185
        %v187 = vrot.slane %v186, 2
        %v188 = vadd.f32 %v186, %v187
        %v189 = vrot.slane %v188, 1
        %v190 = vadd.f32 %v188, %v189
        %s191 = vtos %v190
        %s192 = smul.f32 %s191, 0.015625
        %s193 = sadd.f32 %s192, 1e-05
        %v194 = vstv %s193
        %v195 = vrsqrt.pop %v194
        %s196 = vtos %v195
        %v197 = vld [vmem:[%s1] sm:$0xf]
        %v198 = vstv %s196
        %v199 = vmul.f32 %v197, %v198
        %201 = vset.pattern.permute.xlu0 0
        %202 = vperm.xlu0 %201, %v199
        %v203 = vpop.permute.xlu0 %202
        %v205 = vmul.f32 %v180, %v203
        %v206 = vld [vmem:[%s2] sm:$0xf]
        %208 = vset.pattern.permute.xlu0 0
        %209 = vperm.xlu0 %208, %v206
        %v210 = vpop.permute.xlu0 %209
        %v212 = vadd.f32 %v205, %v210
        %213 = vst.msk [vmem:[%s161] sm:$0xf] %vm167, %v212
        %s214 = sand.u32 %s93, 1
        %s215 = scalar_lea.sflag [#allocation3], %s214
        %s216 = sand.u32 %s93, 1
        %s217 = smul.addr %s216, 4
        %s218 = scalar_lea.vmem [#allocation2], %s217
        // Predicated region
        $region33: #{tpu_custom_call.1} parent=31 // pred_check
          %p219 = pneg %p103
        $region34: #{tpu_custom_call.1} parent=31 // pred_check_branch
          %221 = sbr.rel (%p219) target = $region36
        $region35: #{tpu_custom_call.1} parent=31 // pred_region
          %s223 = ssub.s32 64, 64
          %224 = vsyncadd %s215, %s223
          %s225 = smul.addr %s17, 64
          %s226 = scalar_lea.hbm %s3, %s225
          %s228 = sshll.u32 %s218, 4
          %s229 = int_to_ptr.vmem [resolvable:$true] %s228
          %231 = dma.vmem_to_hbm [thread:$0]  %s229, 64, %s226, %s215
        $region36: #{tpu_custom_call.1} parent=31 // pred_fallthru
          _
      $region32: #{tpu_custom_call.1} parent=5 // pred_fallthru
        _
      %p232 = scmp.le.s32.totalorder 2, %s12
      // Predicated region
      $region37: #{tpu_custom_call.1} parent=5 // pred_check
        %p233 = pneg %p232
      $region38: #{tpu_custom_call.1} parent=5 // pred_check_branch
        %235 = sbr.rel (%p233) target = $region40
      $region39: #{tpu_custom_call.1} parent=5 // pred_region
        %s236 = ssub.s32 %s12, 2
        // Predicated region
        $region41: #{tpu_custom_call.1} parent=39 // pred_check
          %p237 = pneg %p109
        $region42: #{tpu_custom_call.1} parent=39 // pred_check_branch
          %239 = sbr.rel (%p237) target = $region44
        $region43: #{tpu_custom_call.1} parent=39 // pred_region
          %s240 = sand.u32 %s94, 1
          %s241 = scalar_lea.sflag [#allocation3], %s240
          %s242 = sand.u32 %s94, 1
          %s243 = smul.addr %s242, 4
          %s244 = scalar_lea.vmem [#allocation2], %s243
          %245 = dma.done %s241, 64
        $region44: #{tpu_custom_call.1} parent=39 // pred_fallthru
          _
      $region40: #{tpu_custom_call.1} parent=5 // pred_fallthru
        _
    $region6: #{tpu_custom_call.1} parent=1 // loop_footer
      %s16 = sadd.s32 1, %s12
    $region7: #{tpu_custom_call.1} parent=1 // loop_footer_branch
      %11 = sbr.rel target = $region3
    $region8: #{tpu_custom_call.1} parent=1 // loop_exit
      _
    %246 = vsyncpa [#allocation3], 1
    %s247 = scalar_lea.sflag [#allocation3], 1
    %248 = vsyncpa %s247, 1

</llo_original>
